<compile_context>
chip_gen: v6e
topology: v6e:2x2x1
jax: 0.10.0
libtpu: 0.0.40
codegen_flags: <defaults>
</compile_context>

<pallas_src>
import functools

import jax
import jax.numpy as jnp
from jax import lax
from jax.experimental import pallas as pl
from jax.experimental.pallas import tpu as pltpu

LANE = 128      # lane width: pad feature dims to multiples of this
TILE = 256      # row / reduction tile for the N x N propagation matmul


def _round_up(x: int, m: int) -> int:
    return (x + m - 1) // m * m


# ---------------------------------------------------------------------------
# Kernel 1: dense Linear  (out = x @ Wt + b), tiled over rows.
# ---------------------------------------------------------------------------
def _linear_kernel(x_ref, w_ref, b_ref, o_ref):
    x = x_ref[...].astype(jnp.float32)
    o_ref[...] = (jnp.dot(x, w_ref[...], preferred_element_type=jnp.float32)
                  + b_ref[...]).astype(o_ref.dtype)


def _linear(x, wt, b, *, tm):
    n_rows, k = x.shape
    _, m = wt.shape
    return pl.pallas_call(
        _linear_kernel,
        out_shape=jax.ShapeDtypeStruct((n_rows, m), jnp.float32),
        grid=(n_rows // tm,),
        in_specs=[
            pl.BlockSpec((tm, k), lambda i: (i, 0)),
            pl.BlockSpec((k, m), lambda i: (0, 0)),
            pl.BlockSpec((1, m), lambda i: (0, 0)),
        ],
        out_specs=pl.BlockSpec((tm, m), lambda i: (i, 0)),
        compiler_params=pltpu.CompilerParams(
            dimension_semantics=("parallel",)),
    )(x, wt, b)


# ---------------------------------------------------------------------------
# Kernel 2: graph propagation  h_new = Â @ h   (Â is bf16, f32 accumulation).
# Grid: (row blocks  -> "parallel",  reduction blocks -> "arbitrary").
# ---------------------------------------------------------------------------
def _prop_kernel(a_ref, h_ref, o_ref, acc_ref):
    @pl.when(pl.program_id(1) == 0)
    def _():
        acc_ref[...] = jnp.zeros_like(acc_ref)

    acc_ref[...] += jnp.dot(a_ref[...], h_ref[...].astype(jnp.bfloat16),
                            preferred_element_type=jnp.float32)

    @pl.when(pl.program_id(1) == pl.num_programs(1) - 1)
    def _():
        o_ref[...] = acc_ref[...].astype(o_ref.dtype)


def _propagate(a_hat, h, *, tm, tk):
    n_p = a_hat.shape[0]
    hd = h.shape[1]
    n_row_blocks = n_p // tm
    cost = pl.CostEstimate(
        flops=2 * n_p * n_p * hd,
        transcendentals=0,
        bytes_accessed=(n_p * n_p * 2            # Â (bf16) streamed once
                        + n_row_blocks * n_p * hd * 4   # h re-read per row block
                        + n_p * hd * 4))                # h_new written
    return pl.pallas_call(
        _prop_kernel,
        out_shape=jax.ShapeDtypeStruct((n_p, hd), jnp.float32),
        grid=(n_row_blocks, n_p // tk),
        in_specs=[
            pl.BlockSpec((tm, tk), lambda i, k: (i, k)),   # Â tile
            pl.BlockSpec((tk, hd), lambda i, k: (k, 0)),   # h tile
        ],
        out_specs=pl.BlockSpec((tm, hd), lambda i, k: (i, 0)),
        scratch_shapes=[pltpu.VMEM((tm, hd), jnp.float32)],
        compiler_params=pltpu.CompilerParams(
            dimension_semantics=("parallel", "arbitrary")),
        cost_estimate=cost,
    )(a_hat, h)


# ---------------------------------------------------------------------------
# Forward wrapper.
# ---------------------------------------------------------------------------
def gcn_v_forward(adj, features, w0, b0, w1, b1, *, n_layers: int):
    """adj: (N, N) dense adjacency, adj[u, v] = 1 iff edge u -> v.
    features: (N, in_size).
    w0: (hid, in)  b0: (hid,)   (PyTorch nn.Linear layout)
    w1: (out, hid) b1: (out,)
    """
    n, in_size = features.shape
    hid_size = w0.shape[0]
    out_size = w1.shape[0]

    n_p = _round_up(n, TILE)
    in_p = _round_up(in_size, LANE)
    hid_p = _round_up(hid_size, LANE)
    out_p = _round_up(out_size, LANE)
    tm = min(TILE, n_p)
    tk = min(TILE, n_p)

    adj = adj.astype(jnp.float32)
    # Degrees as reductions (not matmuls); normalization + transpose folded once.
    deg_out = jnp.maximum(jnp.sum(adj, axis=1), 1.0)   # (N,)
    deg_in = jnp.maximum(jnp.sum(adj, axis=0), 1.0)    # (N,)
    norm_l = lax.rsqrt(deg_out)                        # out_deg^{-1/2}
    norm_r = lax.rsqrt(deg_in)                         # in_deg^{-1/2}
    a_hat = norm_r[:, None] * adj.T * norm_l[None, :]  # Â = D_in^-1/2 Aᵀ D_out^-1/2
    a_hat = jnp.pad(a_hat, ((0, n_p - n), (0, n_p - n))).astype(jnp.bfloat16)

    # Lane-padded operands (zero padding keeps the math exact; sliced off at end).
    x_p = jnp.pad(features.astype(jnp.float32),
                  ((0, n_p - n), (0, in_p - in_size)))
    w0t = jnp.pad(jnp.transpose(w0).astype(jnp.float32),
                  ((0, in_p - in_size), (0, hid_p - hid_size)))
    b0p = jnp.pad(b0.astype(jnp.float32), (0, hid_p - hid_size)).reshape(1, hid_p)
    w1t = jnp.pad(jnp.transpose(w1).astype(jnp.float32),
                  ((0, hid_p - hid_size), (0, out_p - out_size)))
    b1p = jnp.pad(b1.astype(jnp.float32), (0, out_p - out_size)).reshape(1, out_p)

    # 1) h = x @ W0ᵀ + b0
    h = _linear(x_p, w0t, b0p, tm=tm)
    # 2) n_layers of  h <- Â @ h   (one tiled, pipelined pallas_call per layer;
    #    the call boundary is the natural all-rows sync between layers)
    for _ in range(n_layers):
        h = _propagate(a_hat, h, tm=tm, tk=tk)
    # 3) out = h @ W1ᵀ + b1
    out = _linear(h, w1t, b1p, tm=tm)
    return out[:n, :out_size]


# ---------------------------------------------------------------------------
# Reference (pure JAX, f32) and demo.
# ---------------------------------------------------------------------------
def _reference(adj, features, w0, b0, w1, b1, n_layers):
    deg_out = jnp.maximum(adj.sum(axis=1, keepdims=True), 1.0)
    deg_in = jnp.maximum(adj.sum(axis=0, keepdims=True), 1.0).T
    norm_l = deg_out ** -0.5
    norm_r = deg_in ** -0.5
    h = features @ w0.T + b0
    for _ in range(n_layers):
        h = adj.T @ (h * norm_l)
        h = h * norm_r
    return h @ w1.T + b1


if __name__ == "__main__":
    # small synthetic problem
    N = 64
    in_size = 16
    hid_size = 32
    out_size = 8
    n_layers = 2

    key = jax.random.PRNGKey(0)
    k_adj, k_x, k_w0, k_b0, k_w1, k_b1 = jax.random.split(key, 6)

    # random directed graph as dense adjacency (u -> v)
    adj = (jax.random.uniform(k_adj, (N, N)) < 0.1).astype(jnp.float32)
    features = jax.random.normal(k_x, (N, in_size), dtype=jnp.float32)

    # deterministic parameter init (PyTorch nn.Linear shapes)
    w0 = jax.random.uniform(k_w0, (hid_size, in_size), minval=-0.25, maxval=0.25)
    b0 = jax.random.uniform(k_b0, (hid_size,), minval=-0.25, maxval=0.25)
    w1 = jax.random.uniform(k_w1, (out_size, hid_size), minval=-0.18, maxval=0.18)
    b1 = jax.random.uniform(k_b1, (out_size,), minval=-0.18, maxval=0.18)

    fwd = jax.jit(functools.partial(gcn_v_forward, n_layers=n_layers))
    out = jax.block_until_ready(fwd(adj, features, w0, b0, w1, b1))

    ref = _reference(adj, features, w0, b0, w1, b1, n_layers)
    assert out.shape == (N, out_size)
    # Â (and the h operand of the propagation matmuls) go through bf16 with f32
    # accumulation, so allow small drift vs the all-f32 reference.
    assert jnp.allclose(out, ref, atol=1e-2, rtol=1e-2), "mismatch vs reference"

    print("KERNEL_OK")
</pallas_src>

<mosaic_0001>
module attributes {stable_mosaic.version = 11 : i64} {
  func.func @_linear_kernel(%arg0: i32, %arg1: memref<256x128xf32, #tpu.memory_space<vmem>>, %arg2: memref<128x128xf32, #tpu.memory_space<vmem>>, %arg3: memref<1x128xf32, #tpu.memory_space<vmem>>, %arg4: memref<256x128xf32, #tpu.memory_space<vmem>>) attributes {dimension_semantics = [#tpu.dimension_semantics<parallel>], iteration_bounds = array<i64: 1>, scalar_prefetch = 0 : i64, scratch_operands = 0 : i64, tpu.core_type = #tpu.core_type<tc>, window_params = [{transform_indices = @transform_0, window_bounds = array<i64: 256, 128>}, {pipeline_mode = #tpu.pipeline_mode<synchronous>, transform_indices = @transform_1, window_bounds = array<i64: 128, 128>}, {pipeline_mode = #tpu.pipeline_mode<synchronous>, transform_indices = @transform_2, window_bounds = array<i64: 1, 128>}, {transform_indices = @transform_3, window_bounds = array<i64: 256, 128>}]} {
    %c0 = arith.constant 0 : index
    %c0_0 = arith.constant 0 : index
    %0 = vector.load %arg1[%c0, %c0_0] : memref<256x128xf32, #tpu.memory_space<vmem>>, vector<256x128xf32>
    %c0_1 = arith.constant 0 : index
    %c0_2 = arith.constant 0 : index
    %1 = vector.load %arg2[%c0_1, %c0_2] : memref<128x128xf32, #tpu.memory_space<vmem>>, vector<128x128xf32>
    %cst = arith.constant dense<0.000000e+00> : vector<256x128xf32>
    %2 = tpu.matmul %0, %1, %cst {dimension_numbers = #tpu.dot_dimension_numbers<[1], [0], [0], [1], [0, 0, 1, 1], [], []>} : vector<256x128xf32>, vector<128x128xf32>, vector<256x128xf32> -> vector<256x128xf32>
    %c0_3 = arith.constant 0 : index
    %c0_4 = arith.constant 0 : index
    %3 = vector.load %arg3[%c0_3, %c0_4] : memref<1x128xf32, #tpu.memory_space<vmem>>, vector<1x128xf32>
    %4 = vector.broadcast %3 : vector<1x128xf32> to vector<256x128xf32>
    %5 = arith.addf %2, %4 : vector<256x128xf32>
    %c0_5 = arith.constant 0 : index
    %c0_6 = arith.constant 0 : index
    %6 = vector.load %arg4[%c0_5, %c0_6] : memref<256x128xf32, #tpu.memory_space<vmem>>, vector<256x128xf32>
    tpu.vector_store %arg4[%c0_5, %c0_6], %5 {strides = array<i32>} : memref<256x128xf32, #tpu.memory_space<vmem>>, vector<256x128xf32>,
    return
  }
  func.func @transform_0(%arg0: i32) -> (i32, i32) {
    %c0_i32 = arith.constant 0 : i32
    %c0_i32_0 = arith.constant 0 : i32
    return %arg0, %c0_i32 : i32, i32
  }
  func.func @transform_1(%arg0: i32) -> (i32, i32) {
    %c0_i32 = arith.constant 0 : i32
    %c0_i32_0 = arith.constant 0 : i32
    %c0_i32_1 = arith.constant 0 : i32
    return %c0_i32, %c0_i32_0 : i32, i32
  }
  func.func @transform_2(%arg0: i32) -> (i32, i32) {
    %c0_i32 = arith.constant 0 : i32
    %c0_i32_0 = arith.constant 0 : i32
    %c0_i32_1 = arith.constant 0 : i32
    return %c0_i32, %c0_i32_0 : i32, i32
  }
  func.func @transform_3(%arg0: i32) -> (i32, i32) {
    %c0_i32 = arith.constant 0 : i32
    %c0_i32_0 = arith.constant 0 : i32
    return %arg0, %c0_i32 : i32, i32
  }
}

module attributes {stable_mosaic.version = 11 : i64} {
  func.func @_prop_kernel(%arg0: i32, %arg1: i32, %arg2: memref<256x256xbf16, #tpu.memory_space<vmem>>, %arg3: memref<256x128xf32, #tpu.memory_space<vmem>>, %arg4: memref<256x128xf32, #tpu.memory_space<vmem>>, %arg5: memref<256x128xf32, #tpu.memory_space<vmem>>) attributes {dimension_semantics = [#tpu.dimension_semantics<parallel>, #tpu.dimension_semantics<arbitrary>], iteration_bounds = array<i64: 1, 1>, scalar_prefetch = 0 : i64, scratch_operands = 1 : i64, tpu.core_type = #tpu.core_type<tc>, window_params = [{transform_indices = @transform_0, window_bounds = array<i64: 256, 256>}, {transform_indices = @transform_1, window_bounds = array<i64: 256, 128>}, {transform_indices = @transform_2, window_bounds = array<i64: 256, 128>}]} {
    %c0_i32 = arith.constant 0 : i32
    %0 = arith.cmpi eq, %arg1, %c0_i32 : i32
    %1 = arith.extui %0 : i1 to i32
    %c0_i32_0 = arith.constant 0 : i32
    %2 = arith.cmpi ne, %1, %c0_i32_0 : i32
    scf.if %2 {
      %cst_10 = arith.constant 0.000000e+00 : f32
      %13 = vector.broadcast %cst_10 : f32 to vector<256x128xf32>
      %c0_11 = arith.constant 0 : index
      %c0_12 = arith.constant 0 : index
      %14 = vector.load %arg5[%c0_11, %c0_12] : memref<256x128xf32, #tpu.memory_space<vmem>>, vector<256x128xf32>
      tpu.vector_store %arg5[%c0_11, %c0_12], %13 {strides = array<i32>} : memref<256x128xf32, #tpu.memory_space<vmem>>, vector<256x128xf32>,
    } else {
    }
    %c0 = arith.constant 0 : index
    %c0_1 = arith.constant 0 : index
    %3 = vector.load %arg5[%c0, %c0_1] : memref<256x128xf32, #tpu.memory_space<vmem>>, vector<256x128xf32>
    %c0_2 = arith.constant 0 : index
    %c0_3 = arith.constant 0 : index
    %4 = vector.load %arg2[%c0_2, %c0_3] : memref<256x256xbf16, #tpu.memory_space<vmem>>, vector<256x256xbf16>
    %c0_4 = arith.constant 0 : index
    %c0_5 = arith.constant 0 : index
    %5 = vector.load %arg3[%c0_4, %c0_5] : memref<256x128xf32, #tpu.memory_space<vmem>>, vector<256x128xf32>
    %6 = arith.truncf %5 : vector<256x128xf32> to vector<256x128xbf16>
    %cst = arith.constant dense<0.000000e+00> : vector<256x128xf32>
    %7 = tpu.matmul %4, %6, %cst {dimension_numbers = #tpu.dot_dimension_numbers<[1], [0], [0], [1], [0, 0, 1, 1], [], []>} : vector<256x256xbf16>, vector<256x128xbf16>, vector<256x128xf32> -> vector<256x128xf32>
    %8 = arith.addf %3, %7 : vector<256x128xf32>
    %c0_6 = arith.constant 0 : index
    %c0_7 = arith.constant 0 : index
    %9 = vector.load %arg5[%c0_6, %c0_7] : memref<256x128xf32, #tpu.memory_space<vmem>>, vector<256x128xf32>
    tpu.vector_store %arg5[%c0_6, %c0_7], %8 {strides = array<i32>} : memref<256x128xf32, #tpu.memory_space<vmem>>, vector<256x128xf32>,
    %c0_i32_8 = arith.constant 0 : i32
    %10 = arith.cmpi eq, %arg1, %c0_i32_8 : i32
    %11 = arith.extui %10 : i1 to i32
    %c0_i32_9 = arith.constant 0 : i32
    %12 = arith.cmpi ne, %11, %c0_i32_9 : i32
    scf.if %12 {
      %c0_10 = arith.constant 0 : index
      %c0_11 = arith.constant 0 : index
      %13 = vector.load %arg5[%c0_10, %c0_11] : memref<256x128xf32, #tpu.memory_space<vmem>>, vector<256x128xf32>
      %c0_12 = arith.constant 0 : index
      %c0_13 = arith.constant 0 : index
      %14 = vector.load %arg4[%c0_12, %c0_13] : memref<256x128xf32, #tpu.memory_space<vmem>>, vector<256x128xf32>
      tpu.vector_store %arg4[%c0_12, %c0_13], %13 {strides = array<i32>} : memref<256x128xf32, #tpu.memory_space<vmem>>, vector<256x128xf32>,
    } else {
    }
    return
  }
  func.func @transform_0(%arg0: i32, %arg1: i32) -> (i32, i32) {
    %c0_i32 = arith.constant 0 : i32
    return %arg0, %arg1 : i32, i32
  }
  func.func @transform_1(%arg0: i32, %arg1: i32) -> (i32, i32) {
    %c0_i32 = arith.constant 0 : i32
    %c0_i32_0 = arith.constant 0 : i32
    return %arg1, %c0_i32 : i32, i32
  }
  func.func @transform_2(%arg0: i32, %arg1: i32) -> (i32, i32) {
    %c0_i32 = arith.constant 0 : i32
    %c0_i32_0 = arith.constant 0 : i32
    return %arg0, %c0_i32 : i32, i32
  }
}

</mosaic_0001>

<llo_original>
// kernel: gcn_v_forward.4
$region0: #{gcn_v_forward.4}
  #allocation0 [shape = 'u32[]', space=smem, size = 0x4, offset = 0x4, fixed_abs, tag = 'smem constant byte address 0x4 - core index']
  #allocation1 [shape = 'u32[144,128]{1,0:T(1,128)}', space=vmem, size = 0x12000, scoped, tag = 'internal scratch']
  %s0 = inlined_call_operand.vmem [shape: f32[256,128], index: 0, kind: input, shape index: {}]
  %s1 = inlined_call_operand.vmem [shape: f32[128,128], index: 1, kind: input, shape index: {}]
  %s2 = inlined_call_operand.vmem [shape: f32[1,128], index: 2, kind: input, shape index: {}]
  %s3 = inlined_call_operand.vmem [shape: f32[256,128], index: 3, kind: output, shape index: {}]
  %s4 = sld [smem:[#allocation0]]
  $region22: #{gcn_v_forward.4} parent=0
    _
  %s6 = ssub.s32 1, %s4
  %s7 = scalar_select 0, %s6, %s4
  // Predicated region
  $region2: #{gcn_v_forward.4} parent=0 // pred_check
    _
  $region3: #{gcn_v_forward.4} parent=0 // pred_check_branch
    %9 = sbr.rel (0) target = $region5
  $region4: #{gcn_v_forward.4} parent=0 // pred_region
    _
  $region5: #{gcn_v_forward.4} parent=0 // pred_fallthru
    _
  // Predicated region
  $region6: #{gcn_v_forward.4} parent=0 // pred_check
    _
  $region7: #{gcn_v_forward.4} parent=0 // pred_check_branch
    %11 = sbr.rel (0) target = $region9
  $region8: #{gcn_v_forward.4} parent=0 // pred_region
    _
  $region9: #{gcn_v_forward.4} parent=0 // pred_fallthru
    _
  // Predicated region
  $region10: #{gcn_v_forward.4} parent=0 // pred_check
    _
  $region11: #{gcn_v_forward.4} parent=0 // pred_check_branch
    %13 = sbr.rel (0) target = $region13
  $region12: #{gcn_v_forward.4} parent=0 // pred_region
    _
  $region13: #{gcn_v_forward.4} parent=0 // pred_fallthru
    _
  %v14 = vld [vmem:[%s0] sm:$0xff]
  %v15 = vld [vmem:[%s0 + $0x8] sm:$0xff]
  %v16 = vld [vmem:[%s0 + $0x10] sm:$0xff]
  %v17 = vld [vmem:[%s0 + $0x18] sm:$0xff]
  %v18 = vld [vmem:[%s0 + $0x20] sm:$0xff]
  %v19 = vld [vmem:[%s0 + $0x28] sm:$0xff]
  %v20 = vld [vmem:[%s0 + $0x30] sm:$0xff]
  %v21 = vld [vmem:[%s0 + $0x38] sm:$0xff]
  %v22 = vld [vmem:[%s0 + $0x40] sm:$0xff]
  %v23 = vld [vmem:[%s0 + $0x48] sm:$0xff]
  %v24 = vld [vmem:[%s0 + $0x50] sm:$0xff]
  %v25 = vld [vmem:[%s0 + $0x58] sm:$0xff]
  %v26 = vld [vmem:[%s0 + $0x60] sm:$0xff]
  %v27 = vld [vmem:[%s0 + $0x68] sm:$0xff]
  %v28 = vld [vmem:[%s0 + $0x70] sm:$0xff]
  %v29 = vld [vmem:[%s0 + $0x78] sm:$0xff]
  %v30 = vld [vmem:[%s0 + $0x80] sm:$0xff]
  %v31 = vld [vmem:[%s0 + $0x88] sm:$0xff]
  %v32 = vld [vmem:[%s0 + $0x90] sm:$0xff]
  %v33 = vld [vmem:[%s0 + $0x98] sm:$0xff]
  %v34 = vld [vmem:[%s0 + $0xa0] sm:$0xff]
  %v35 = vld [vmem:[%s0 + $0xa8] sm:$0xff]
  %v36 = vld [vmem:[%s0 + $0xb0] sm:$0xff]
  %v37 = vld [vmem:[%s0 + $0xb8] sm:$0xff]
  %v38 = vld [vmem:[%s0 + $0xc0] sm:$0xff]
  %v39 = vld [vmem:[%s0 + $0xc8] sm:$0xff]
  %v40 = vld [vmem:[%s0 + $0xd0] sm:$0xff]
  %v41 = vld [vmem:[%s0 + $0xd8] sm:$0xff]
  %v42 = vld [vmem:[%s0 + $0xe0] sm:$0xff]
  %v43 = vld [vmem:[%s0 + $0xe8] sm:$0xff]
  %v44 = vld [vmem:[%s0 + $0xf0] sm:$0xff]
  %v45 = vld [vmem:[%s0 + $0xf8] sm:$0xff]
  %v46 = vld [vmem:[%s1] sm:$0xff]
  %v47 = vld [vmem:[%s1 + $0x8] sm:$0xff]
  %v48 = vld [vmem:[%s1 + $0x10] sm:$0xff]
  %v49 = vld [vmem:[%s1 + $0x18] sm:$0xff]
  %v50 = vld [vmem:[%s1 + $0x20] sm:$0xff]
  %v51 = vld [vmem:[%s1 + $0x28] sm:$0xff]
  %v52 = vld [vmem:[%s1 + $0x30] sm:$0xff]
  %v53 = vld [vmem:[%s1 + $0x38] sm:$0xff]
  %v54 = vld [vmem:[%s1 + $0x40] sm:$0xff]
  %v55 = vld [vmem:[%s1 + $0x48] sm:$0xff]
  %v56 = vld [vmem:[%s1 + $0x50] sm:$0xff]
  %v57 = vld [vmem:[%s1 + $0x58] sm:$0xff]
  %v58 = vld [vmem:[%s1 + $0x60] sm:$0xff]
  %v59 = vld [vmem:[%s1 + $0x68] sm:$0xff]
  %v60 = vld [vmem:[%s1 + $0x70] sm:$0xff]
  %v61 = vld [vmem:[%s1 + $0x78] sm:$0xff]
  %v62 = vld [vmem:[%s2] sm:$0x1]
  %v64 = vlaneseq
  %v65 = vshrl.u32 %v64, 7
  %v66 = vsub.s32 0, %v65
  %v67 = vrot.slane %v62, %v66
  %69 = vmatprep.subr.mxu0 0.0
  %70 = vmatpush1.msra.mxu0 %v61
  %71 = vmatprep.subr.mxu0 0.0
  %72 = vmatpush1.msra.mxu0 %v60
  %73 = vmatprep.subr.mxu0 0.0
  %74 = vmatpush1.msra.mxu0 %v59
  %75 = vmatprep.subr.mxu0 0.0
  %76 = vmatpush1.msra.mxu0 %v58
  %77 = vmatprep.subr.mxu0 0.0
  %78 = vmatpush1.msra.mxu0 %v57
  %79 = vmatprep.subr.mxu0 0.0
  %80 = vmatpush1.msra.mxu0 %v56
  %81 = vmatprep.subr.mxu0 0.0
  %82 = vmatpush1.msra.mxu0 %v55
  %83 = vmatprep.subr.mxu0 0.0
  %84 = vmatpush1.msra.mxu0 %v54
  %85 = vmatprep.subr.mxu0 0.0
  %86 = vmatpush1.msra.mxu0 %v53
  %87 = vmatprep.subr.mxu0 0.0
  %88 = vmatpush1.msra.mxu0 %v52
  %89 = vmatprep.subr.mxu0 0.0
  %90 = vmatpush1.msra.mxu0 %v51
  %91 = vmatprep.subr.mxu0 0.0
  %92 = vmatpush1.msra.mxu0 %v50
  %93 = vmatprep.subr.mxu0 0.0
  %94 = vmatpush1.msra.mxu0 %v49
  %95 = vmatprep.subr.mxu0 0.0
  %96 = vmatpush1.msra.mxu0 %v48
  %97 = vmatprep.subr.mxu0 0.0
  %98 = vmatpush1.msra.mxu0 %v47
  %99 = vmatprep.subr.mxu0 0.0
  %100 = vmatpush1.msra.mxu0 %v46
  %101 = vmatprep.subr.mxu0 0.0
  %102 = vmatpush2.msra.mxu0 0.0
  %103 = vmatprep.subr.mxu0 0.0
  %104 = vmatpush2.msra.mxu0 0.0
  %105 = vmatprep.subr.mxu0 0.0
  %106 = vmatpush2.msra.mxu0 0.0
  %107 = vmatprep.subr.mxu0 0.0
  %108 = vmatpush2.msra.mxu0 0.0
  %109 = vmatprep.subr.mxu0 0.0
  %110 = vmatpush2.msra.mxu0 0.0
  %111 = vmatprep.subr.mxu0 0.0
  %112 = vmatpush2.msra.mxu0 0.0
  %113 = vmatprep.subr.mxu0 0.0
  %114 = vmatpush2.msra.mxu0 0.0
  %115 = vmatprep.subr.mxu0 0.0
  %116 = vmatpush2.msra.mxu0 0.0
  %117 = vmatprep.subr.mxu0 0.0
  %118 = vmatpush2.msra.mxu0 0.0
  %119 = vmatprep.subr.mxu0 0.0
  %120 = vmatpush2.msra.mxu0 0.0
  %121 = vmatprep.subr.mxu0 0.0
  %122 = vmatpush2.msra.mxu0 0.0
  %123 = vmatprep.subr.mxu0 0.0
  %124 = vmatpush2.msra.mxu0 0.0
  %125 = vmatprep.subr.mxu0 0.0
  %126 = vmatpush2.msra.mxu0 0.0
  %127 = vmatprep.subr.mxu0 0.0
  %128 = vmatpush2.msra.mxu0 0.0
  %129 = vmatprep.subr.mxu0 0.0
  %130 = vmatpush2.msra.mxu0 0.0
  %131 = vmatprep.subr.mxu0 0.0
  %132 = vmatpush2.msra.mxu0 0.0
  %133 = vmatprep.mubr.f32.mxu0 0.0
  %134 = vmatmul.mubr.f32.gmra.mxu0 %v14
  %v135 = vpop.f32.mrf.mxu0
  %v136 = vadd.f32 %v67, %v135
  %v137 = vpop.f32.mrf.mxu0
  %138 = vmatprep.mubr.f32.mxu0 0.0
  %139 = vmatmul.mubr.f32.gmra.mxu0 %v15
  %v140 = vpop.f32.mrf.mxu0
  %v141 = vadd.f32 %v67, %v140
  %v142 = vpop.f32.mrf.mxu0
  %143 = vmatprep.mubr.f32.mxu0 0.0
  %144 = vmatmul.mubr.f32.gmra.mxu0 %v16
  %v145 = vpop.f32.mrf.mxu0
  %v146 = vadd.f32 %v67, %v145
  %v147 = vpop.f32.mrf.mxu0
  %148 = vmatprep.mubr.f32.mxu0 0.0
  %149 = vmatmul.mubr.f32.gmra.mxu0 %v17
  %v150 = vpop.f32.mrf.mxu0
  %v151 = vadd.f32 %v67, %v150
  %v152 = vpop.f32.mrf.mxu0
  %153 = vmatprep.mubr.f32.mxu0 0.0
  %154 = vmatmul.mubr.f32.gmra.mxu0 %v18
  %v155 = vpop.f32.mrf.mxu0
  %v156 = vadd.f32 %v67, %v155
  %v157 = vpop.f32.mrf.mxu0
  %158 = vmatprep.mubr.f32.mxu0 0.0
  %159 = vmatmul.mubr.f32.gmra.mxu0 %v19
  %v160 = vpop.f32.mrf.mxu0
  %v161 = vadd.f32 %v67, %v160
  %v162 = vpop.f32.mrf.mxu0
  %163 = vmatprep.mubr.f32.mxu0 0.0
  %164 = vmatmul.mubr.f32.gmra.mxu0 %v20
  %v165 = vpop.f32.mrf.mxu0
  %v166 = vadd.f32 %v67, %v165
  %v167 = vpop.f32.mrf.mxu0
  %168 = vmatprep.mubr.f32.mxu0 0.0
  %169 = vmatmul.mubr.f32.gmra.mxu0 %v21
  %v170 = vpop.f32.mrf.mxu0
  %v171 = vadd.f32 %v67, %v170
  %v172 = vpop.f32.mrf.mxu0
  %173 = vmatprep.mubr.f32.mxu0 0.0
  %174 = vmatmul.mubr.f32.gmra.mxu0 %v22
  %v175 = vpop.f32.mrf.mxu0
  %v176 = vadd.f32 %v67, %v175
  %v177 = vpop.f32.mrf.mxu0
  %178 = vmatprep.mubr.f32.mxu0 0.0
  %179 = vmatmul.mubr.f32.gmra.mxu0 %v23
  %v180 = vpop.f32.mrf.mxu0
  %v181 = vadd.f32 %v67, %v180
  %v182 = vpop.f32.mrf.mxu0
  %183 = vmatprep.mubr.f32.mxu0 0.0
  %184 = vmatmul.mubr.f32.gmra.mxu0 %v24
  %v185 = vpop.f32.mrf.mxu0
  %v186 = vadd.f32 %v67, %v185
  %v187 = vpop.f32.mrf.mxu0
  %188 = vmatprep.mubr.f32.mxu0 0.0
  %189 = vmatmul.mubr.f32.gmra.mxu0 %v25
  %v190 = vpop.f32.mrf.mxu0
  %v191 = vadd.f32 %v67, %v190
  %v192 = vpop.f32.mrf.mxu0
  %193 = vmatprep.mubr.f32.mxu0 0.0
  %194 = vmatmul.mubr.f32.gmra.mxu0 %v26
  %v195 = vpop.f32.mrf.mxu0
  %v196 = vadd.f32 %v67, %v195
  %v197 = vpop.f32.mrf.mxu0
  %198 = vmatprep.mubr.f32.mxu0 0.0
  %199 = vmatmul.mubr.f32.gmra.mxu0 %v27
  %v200 = vpop.f32.mrf.mxu0
  %v201 = vadd.f32 %v67, %v200
  %v202 = vpop.f32.mrf.mxu0
  %203 = vmatprep.mubr.f32.mxu0 0.0
  %204 = vmatmul.mubr.f32.gmra.mxu0 %v28
  %v205 = vpop.f32.mrf.mxu0
  %v206 = vadd.f32 %v67, %v205
  %v207 = vpop.f32.mrf.mxu0
  %208 = vmatprep.mubr.f32.mxu0 0.0
  %209 = vmatmul.mubr.f32.gmra.mxu0 %v29
  %v210 = vpop.f32.mrf.mxu0
  %v211 = vadd.f32 %v67, %v210
  %v212 = vpop.f32.mrf.mxu0
  %213 = vmatprep.mubr.f32.mxu0 0.0
  %214 = vmatmul.mubr.f32.gmra.mxu0 %v30
  %v215 = vpop.f32.mrf.mxu0
  %v216 = vadd.f32 %v67, %v215
  %v217 = vpop.f32.mrf.mxu0
  %218 = vmatprep.mubr.f32.mxu0 0.0
  %219 = vmatmul.mubr.f32.gmra.mxu0 %v31
  %v220 = vpop.f32.mrf.mxu0
  %v221 = vadd.f32 %v67, %v220
  %v222 = vpop.f32.mrf.mxu0
  %223 = vmatprep.mubr.f32.mxu0 0.0
  %224 = vmatmul.mubr.f32.gmra.mxu0 %v32
  %v225 = vpop.f32.mrf.mxu0
  %v226 = vadd.f32 %v67, %v225
  %v227 = vpop.f32.mrf.mxu0
  %228 = vmatprep.mubr.f32.mxu0 0.0
  %229 = vmatmul.mubr.f32.gmra.mxu0 %v33
  %v230 = vpop.f32.mrf.mxu0
  %v231 = vadd.f32 %v67, %v230
  %v232 = vpop.f32.mrf.mxu0
  %233 = vmatprep.mubr.f32.mxu0 0.0
  %234 = vmatmul.mubr.f32.gmra.mxu0 %v34
  %v235 = vpop.f32.mrf.mxu0
  %v236 = vadd.f32 %v67, %v235
  %v237 = vpop.f32.mrf.mxu0
  %238 = vmatprep.mubr.f32.mxu0 0.0
  %239 = vmatmul.mubr.f32.gmra.mxu0 %v35
  %v240 = vpop.f32.mrf.mxu0
  %v241 = vadd.f32 %v67, %v240
  %v242 = vpop.f32.mrf.mxu0
  %243 = vmatprep.mubr.f32.mxu0 0.0
  %244 = vmatmul.mubr.f32.gmra.mxu0 %v36
  %v245 = vpop.f32.mrf.mxu0
  %v246 = vadd.f32 %v67, %v245
  %v247 = vpop.f32.mrf.mxu0
  %248 = vmatprep.mubr.f32.mxu0 0.0
  %249 = vmatmul.mubr.f32.gmra.mxu0 %v37
  %v250 = vpop.f32.mrf.mxu0
  %v251 = vadd.f32 %v67, %v250
  %v252 = vpop.f32.mrf.mxu0
  %253 = vmatprep.mubr.f32.mxu0 0.0
  %254 = vmatmul.mubr.f32.gmra.mxu0 %v38
  %v255 = vpop.f32.mrf.mxu0
  %v256 = vadd.f32 %v67, %v255
  %v257 = vpop.f32.mrf.mxu0
  %258 = vmatprep.mubr.f32.mxu0 0.0
  %259 = vmatmul.mubr.f32.gmra.mxu0 %v39
  %v260 = vpop.f32.mrf.mxu0
  %v261 = vadd.f32 %v67, %v260
  %v262 = vpop.f32.mrf.mxu0
  %263 = vmatprep.mubr.f32.mxu0 0.0
  %264 = vmatmul.mubr.f32.gmra.mxu0 %v40
  %v265 = vpop.f32.mrf.mxu0
  %v266 = vadd.f32 %v67, %v265
  %v267 = vpop.f32.mrf.mxu0
  %268 = vmatprep.mubr.f32.mxu0 0.0
  %269 = vmatmul.mubr.f32.gmra.mxu0 %v41
  %v270 = vpop.f32.mrf.mxu0
  %v271 = vadd.f32 %v67, %v270
  %v272 = vpop.f32.mrf.mxu0
  %273 = vmatprep.mubr.f32.mxu0 0.0
  %274 = vmatmul.mubr.f32.gmra.mxu0 %v42
  %v275 = vpop.f32.mrf.mxu0
  %v276 = vadd.f32 %v67, %v275
  %v277 = vpop.f32.mrf.mxu0
  %278 = vmatprep.mubr.f32.mxu0 0.0
  %279 = vmatmul.mubr.f32.gmra.mxu0 %v43
  %v280 = vpop.f32.mrf.mxu0
  %v281 = vadd.f32 %v67, %v280
  %v282 = vpop.f32.mrf.mxu0
  %283 = vmatprep.mubr.f32.mxu0 0.0
  %284 = vmatmul.mubr.f32.gmra.mxu0 %v44
  %v285 = vpop.f32.mrf.mxu0
  %v286 = vadd.f32 %v67, %v285
  %v287 = vpop.f32.mrf.mxu0
  %288 = vmatprep.mubr.f32.mxu0 0.0
  %289 = vmatmul.mubr.f32.gmra.mxu0 %v45
  %v290 = vpop.f32.mrf.mxu0
  %v291 = vadd.f32 %v67, %v290
  %v292 = vpop.f32.mrf.mxu0
  %293 = vdwg.mxu0
  %294 = vst [vmem:[%s3] sm:$0xff] %v136
  %295 = vst [vmem:[%s3 + $0x8] sm:$0xff] %v141
  %296 = vst [vmem:[%s3 + $0x10] sm:$0xff] %v146
  %297 = vst [vmem:[%s3 + $0x18] sm:$0xff] %v151
  %298 = vst [vmem:[%s3 + $0x20] sm:$0xff] %v156
  %299 = vst [vmem:[%s3 + $0x28] sm:$0xff] %v161
  %300 = vst [vmem:[%s3 + $0x30] sm:$0xff] %v166
  %301 = vst [vmem:[%s3 + $0x38] sm:$0xff] %v171
  %302 = vst [vmem:[%s3 + $0x40] sm:$0xff] %v176
  %303 = vst [vmem:[%s3 + $0x48] sm:$0xff] %v181
  %304 = vst [vmem:[%s3 + $0x50] sm:$0xff] %v186
  %305 = vst [vmem:[%s3 + $0x58] sm:$0xff] %v191
  %306 = vst [vmem:[%s3 + $0x60] sm:$0xff] %v196
  %307 = vst [vmem:[%s3 + $0x68] sm:$0xff] %v201
  %308 = vst [vmem:[%s3 + $0x70] sm:$0xff] %v206
  %309 = vst [vmem:[%s3 + $0x78] sm:$0xff] %v211
  %310 = vst [vmem:[%s3 + $0x80] sm:$0xff] %v216
  %311 = vst [vmem:[%s3 + $0x88] sm:$0xff] %v221
  %312 = vst [vmem:[%s3 + $0x90] sm:$0xff] %v226
  %313 = vst [vmem:[%s3 + $0x98] sm:$0xff] %v231
  %314 = vst [vmem:[%s3 + $0xa0] sm:$0xff] %v236
  %315 = vst [vmem:[%s3 + $0xa8] sm:$0xff] %v241
  %316 = vst [vmem:[%s3 + $0xb0] sm:$0xff] %v246
  %317 = vst [vmem:[%s3 + $0xb8] sm:$0xff] %v251
  %318 = vst [vmem:[%s3 + $0xc0] sm:$0xff] %v256
  %319 = vst [vmem:[%s3 + $0xc8] sm:$0xff] %v261
  %320 = vst [vmem:[%s3 + $0xd0] sm:$0xff] %v266
  %321 = vst [vmem:[%s3 + $0xd8] sm:$0xff] %v271
  %322 = vst [vmem:[%s3 + $0xe0] sm:$0xff] %v276
  %323 = vst [vmem:[%s3 + $0xe8] sm:$0xff] %v281
  %324 = vst [vmem:[%s3 + $0xf0] sm:$0xff] %v286
  %325 = vst [vmem:[%s3 + $0xf8] sm:$0xff] %v291
  // Predicated region
  $region14: #{gcn_v_forward.4} parent=0 // pred_check
    _
  $region15: #{gcn_v_forward.4} parent=0 // pred_check_branch
    %327 = sbr.rel (0) target = $region17
  $region16: #{gcn_v_forward.4} parent=0 // pred_region
    _
  $region17: #{gcn_v_forward.4} parent=0 // pred_fallthru
    _
  // Predicated region
  $region18: #{gcn_v_forward.4} parent=0 // pred_check
    _
  $region19: #{gcn_v_forward.4} parent=0 // pred_check_branch
    %329 = sbr.rel (0) target = $region21
  $region20: #{gcn_v_forward.4} parent=0 // pred_region
    _
  $region21: #{gcn_v_forward.4} parent=0 // pred_fallthru
    _

// kernel: gcn_v_forward.5
$region0: #{gcn_v_forward.5}
  #allocation0 [shape = 'u32[]', space=smem, size = 0x4, offset = 0x4, fixed_abs, tag = 'smem constant byte address 0x4 - core index']
  #allocation1 [shape = 'u32[144,128]{1,0:T(1,128)}', space=vmem, size = 0x12000, scoped, tag = 'internal scratch']
  #allocation2 [shape = 'f32[256,128]{1,0:T(8,128)}', space=vmem, size = 0x20000, scoped, tag = 'scratch operand']
  %s0 = inlined_call_operand.vmem [shape: bf16[256,256], index: 0, kind: input, shape index: {}]
  %s1 = inlined_call_operand.vmem [shape: f32[256,128], index: 1, kind: input, shape index: {}]
  %s2 = inlined_call_operand.vmem [shape: f32[256,128], index: 2, kind: output, shape index: {}]
  %s3 = sld [smem:[#allocation0]]
  $region26: #{gcn_v_forward.5} parent=0
    _
  %s5 = ssub.s32 1, %s3
  %s6 = scalar_select 0, %s5, %s3
  // Predicated region
  $region2: #{gcn_v_forward.5} parent=0 // pred_check
    _
  $region3: #{gcn_v_forward.5} parent=0 // pred_check_branch
    %8 = sbr.rel (0) target = $region5
  $region4: #{gcn_v_forward.5} parent=0 // pred_region
    _
  $region5: #{gcn_v_forward.5} parent=0 // pred_fallthru
    _
  // Predicated region
  $region6: #{gcn_v_forward.5} parent=0 // pred_check
    _
  $region7: #{gcn_v_forward.5} parent=0 // pred_check_branch
    %10 = sbr.rel (0) target = $region9
  $region8: #{gcn_v_forward.5} parent=0 // pred_region
    _
  $region9: #{gcn_v_forward.5} parent=0 // pred_fallthru
    _
  %p12 = scmp.eq.s32.totalorder 0, 0
  // Predicated region
  $region10: #{gcn_v_forward.5} parent=0 // pred_check
    %p13 = pneg %p12
  $region11: #{gcn_v_forward.5} parent=0 // pred_check_branch
    %15 = sbr.rel (%p13) target = $region13
  $region12: #{gcn_v_forward.5} parent=0 // pred_region
    %16 = vst [vmem:[#allocation2] sm:$0xff] 0.0
    %17 = vst [vmem:[#allocation2 + $0x8] sm:$0xff] 0.0
    %18 = vst [vmem:[#allocation2 + $0x10] sm:$0xff] 0.0
    %19 = vst [vmem:[#allocation2 + $0x18] sm:$0xff] 0.0
    %20 = vst [vmem:[#allocation2 + $0x20] sm:$0xff] 0.0
    %21 = vst [vmem:[#allocation2 + $0x28] sm:$0xff] 0.0
    %22 = vst [vmem:[#allocation2 + $0x30] sm:$0xff] 0.0
    %23 = vst [vmem:[#allocation2 + $0x38] sm:$0xff] 0.0
    %24 = vst [vmem:[#allocation2 + $0x40] sm:$0xff] 0.0
    %25 = vst [vmem:[#allocation2 + $0x48] sm:$0xff] 0.0
    %26 = vst [vmem:[#allocation2 + $0x50] sm:$0xff] 0.0
    %27 = vst [vmem:[#allocation2 + $0x58] sm:$0xff] 0.0
    %28 = vst [vmem:[#allocation2 + $0x60] sm:$0xff] 0.0
    %29 = vst [vmem:[#allocation2 + $0x68] sm:$0xff] 0.0
    %30 = vst [vmem:[#allocation2 + $0x70] sm:$0xff] 0.0
    %31 = vst [vmem:[#allocation2 + $0x78] sm:$0xff] 0.0
    %32 = vst [vmem:[#allocation2 + $0x80] sm:$0xff] 0.0
    %33 = vst [vmem:[#allocation2 + $0x88] sm:$0xff] 0.0
    %34 = vst [vmem:[#allocation2 + $0x90] sm:$0xff] 0.0
    %35 = vst [vmem:[#allocation2 + $0x98] sm:$0xff] 0.0
    %36 = vst [vmem:[#allocation2 + $0xa0] sm:$0xff] 0.0
    %37 = vst [vmem:[#allocation2 + $0xa8] sm:$0xff] 0.0
    %38 = vst [vmem:[#allocation2 + $0xb0] sm:$0xff] 0.0
    %39 = vst [vmem:[#allocation2 + $0xb8] sm:$0xff] 0.0
    %40 = vst [vmem:[#allocation2 + $0xc0] sm:$0xff] 0.0
    %41 = vst [vmem:[#allocation2 + $0xc8] sm:$0xff] 0.0
    %42 = vst [vmem:[#allocation2 + $0xd0] sm:$0xff] 0.0
    %43 = vst [vmem:[#allocation2 + $0xd8] sm:$0xff] 0.0
    %44 = vst [vmem:[#allocation2 + $0xe0] sm:$0xff] 0.0
    %45 = vst [vmem:[#allocation2 + $0xe8] sm:$0xff] 0.0
    %46 = vst [vmem:[#allocation2 + $0xf0] sm:$0xff] 0.0
    %47 = vst [vmem:[#allocation2 + $0xf8] sm:$0xff] 0.0
  $region13: #{gcn_v_forward.5} parent=0 // pred_fallthru
    _
  %v48 = vld [vmem:[#allocation2] sm:$0xff]
  %v49 = vld [vmem:[#allocation2 + $0x8] sm:$0xff]
  %v50 = vld [vmem:[#allocation2 + $0x10] sm:$0xff]
  %v51 = vld [vmem:[#allocation2 + $0x18] sm:$0xff]
  %v52 = vld [vmem:[#allocation2 + $0x20] sm:$0xff]
  %v53 = vld [vmem:[#allocation2 + $0x28] sm:$0xff]
  %v54 = vld [vmem:[#allocation2 + $0x30] sm:$0xff]
  %v55 = vld [vmem:[#allocation2 + $0x38] sm:$0xff]
  %v56 = vld [vmem:[#allocation2 + $0x40] sm:$0xff]
  %v57 = vld [vmem:[#allocation2 + $0x48] sm:$0xff]
  %v58 = vld [vmem:[#allocation2 + $0x50] sm:$0xff]
  %v59 = vld [vmem:[#allocation2 + $0x58] sm:$0xff]
  %v60 = vld [vmem:[#allocation2 + $0x60] sm:$0xff]
  %v61 = vld [vmem:[#allocation2 + $0x68] sm:$0xff]
  %v62 = vld [vmem:[#allocation2 + $0x70] sm:$0xff]
  %v63 = vld [vmem:[#allocation2 + $0x78] sm:$0xff]
  %v64 = vld [vmem:[#allocation2 + $0x80] sm:$0xff]
  %v65 = vld [vmem:[#allocation2 + $0x88] sm:$0xff]
  %v66 = vld [vmem:[#allocation2 + $0x90] sm:$0xff]
  %v67 = vld [vmem:[#allocation2 + $0x98] sm:$0xff]
  %v68 = vld [vmem:[#allocation2 + $0xa0] sm:$0xff]
  %v69 = vld [vmem:[#allocation2 + $0xa8] sm:$0xff]
  %v70 = vld [vmem:[#allocation2 + $0xb0] sm:$0xff]
  %v71 = vld [vmem:[#allocation2 + $0xb8] sm:$0xff]
  %v72 = vld [vmem:[#allocation2 + $0xc0] sm:$0xff]
  %v73 = vld [vmem:[#allocation2 + $0xc8] sm:$0xff]
  %v74 = vld [vmem:[#allocation2 + $0xd0] sm:$0xff]
  %v75 = vld [vmem:[#allocation2 + $0xd8] sm:$0xff]
  %v76 = vld [vmem:[#allocation2 + $0xe0] sm:$0xff]
  %v77 = vld [vmem:[#allocation2 + $0xe8] sm:$0xff]
  %v78 = vld [vmem:[#allocation2 + $0xf0] sm:$0xff]
  %v79 = vld [vmem:[#allocation2 + $0xf8] sm:$0xff]
  %v80 = vld [vmem:[%s0] sm:$0xff]
  %v81 = vld [vmem:[%s0 + $0x8] sm:$0xff]
  %v82 = vld [vmem:[%s0 + $0x10] sm:$0xff]
  %v83 = vld [vmem:[%s0 + $0x18] sm:$0xff]
  %v84 = vld [vmem:[%s0 + $0x20] sm:$0xff]
  %v85 = vld [vmem:[%s0 + $0x28] sm:$0xff]
  %v86 = vld [vmem:[%s0 + $0x30] sm:$0xff]
  %v87 = vld [vmem:[%s0 + $0x38] sm:$0xff]
  %v88 = vld [vmem:[%s0 + $0x40] sm:$0xff]
  %v89 = vld [vmem:[%s0 + $0x48] sm:$0xff]
  %v90 = vld [vmem:[%s0 + $0x50] sm:$0xff]
  %v91 = vld [vmem:[%s0 + $0x58] sm:$0xff]
  %v92 = vld [vmem:[%s0 + $0x60] sm:$0xff]
  %v93 = vld [vmem:[%s0 + $0x68] sm:$0xff]
  %v94 = vld [vmem:[%s0 + $0x70] sm:$0xff]
  %v95 = vld [vmem:[%s0 + $0x78] sm:$0xff]
  %v96 = vld [vmem:[%s0 + $0x80] sm:$0xff]
  %v97 = vld [vmem:[%s0 + $0x88] sm:$0xff]
  %v98 = vld [vmem:[%s0 + $0x90] sm:$0xff]
  %v99 = vld [vmem:[%s0 + $0x98] sm:$0xff]
  %v100 = vld [vmem:[%s0 + $0xa0] sm:$0xff]
  %v101 = vld [vmem:[%s0 + $0xa8] sm:$0xff]
  %v102 = vld [vmem:[%s0 + $0xb0] sm:$0xff]
  %v103 = vld [vmem:[%s0 + $0xb8] sm:$0xff]
  %v104 = vld [vmem:[%s0 + $0xc0] sm:$0xff]
  %v105 = vld [vmem:[%s0 + $0xc8] sm:$0xff]
  %v106 = vld [vmem:[%s0 + $0xd0] sm:$0xff]
  %v107 = vld [vmem:[%s0 + $0xd8] sm:$0xff]
  %v108 = vld [vmem:[%s0 + $0xe0] sm:$0xff]
  %v109 = vld [vmem:[%s0 + $0xe8] sm:$0xff]
  %v110 = vld [vmem:[%s0 + $0xf0] sm:$0xff]
  %v111 = vld [vmem:[%s0 + $0xf8] sm:$0xff]
  %v112 = vld [vmem:[%s1] sm:$0xff]
  %v113 = vld [vmem:[%s1 + $0x8] sm:$0xff]
  %v114 = vld [vmem:[%s1 + $0x10] sm:$0xff]
  %v115 = vld [vmem:[%s1 + $0x18] sm:$0xff]
  %v116 = vld [vmem:[%s1 + $0x20] sm:$0xff]
  %v117 = vld [vmem:[%s1 + $0x28] sm:$0xff]
  %v118 = vld [vmem:[%s1 + $0x30] sm:$0xff]
  %v119 = vld [vmem:[%s1 + $0x38] sm:$0xff]
  %v120 = vld [vmem:[%s1 + $0x40] sm:$0xff]
  %v121 = vld [vmem:[%s1 + $0x48] sm:$0xff]
  %v122 = vld [vmem:[%s1 + $0x50] sm:$0xff]
  %v123 = vld [vmem:[%s1 + $0x58] sm:$0xff]
  %v124 = vld [vmem:[%s1 + $0x60] sm:$0xff]
  %v125 = vld [vmem:[%s1 + $0x68] sm:$0xff]
  %v126 = vld [vmem:[%s1 + $0x70] sm:$0xff]
  %v127 = vld [vmem:[%s1 + $0x78] sm:$0xff]
  %v128 = vld [vmem:[%s1 + $0x80] sm:$0xff]
  %v129 = vld [vmem:[%s1 + $0x88] sm:$0xff]
  %v130 = vld [vmem:[%s1 + $0x90] sm:$0xff]
  %v131 = vld [vmem:[%s1 + $0x98] sm:$0xff]
  %v132 = vld [vmem:[%s1 + $0xa0] sm:$0xff]
  %v133 = vld [vmem:[%s1 + $0xa8] sm:$0xff]
  %v134 = vld [vmem:[%s1 + $0xb0] sm:$0xff]
  %v135 = vld [vmem:[%s1 + $0xb8] sm:$0xff]
  %v136 = vld [vmem:[%s1 + $0xc0] sm:$0xff]
  %v137 = vld [vmem:[%s1 + $0xc8] sm:$0xff]
  %v138 = vld [vmem:[%s1 + $0xd0] sm:$0xff]
  %v139 = vld [vmem:[%s1 + $0xd8] sm:$0xff]
  %v140 = vld [vmem:[%s1 + $0xe0] sm:$0xff]
  %v141 = vld [vmem:[%s1 + $0xe8] sm:$0xff]
  %v142 = vld [vmem:[%s1 + $0xf0] sm:$0xff]
  %v143 = vld [vmem:[%s1 + $0xf8] sm:$0xff]
  %v144 = vpack.c.bf16 %v113, %v112
  %v145 = vpack.c.bf16 %v115, %v114
  %v146 = vpack.c.bf16 %v117, %v116
  %v147 = vpack.c.bf16 %v119, %v118
  %v148 = vpack.c.bf16 %v121, %v120
  %v149 = vpack.c.bf16 %v123, %v122
  %v150 = vpack.c.bf16 %v125, %v124
  %v151 = vpack.c.bf16 %v127, %v126
  %v152 = vpack.c.bf16 %v129, %v128
  %v153 = vpack.c.bf16 %v131, %v130
  %v154 = vpack.c.bf16 %v133, %v132
  %v155 = vpack.c.bf16 %v135, %v134
  %v156 = vpack.c.bf16 %v137, %v136
  %v157 = vpack.c.bf16 %v139, %v138
  %v158 = vpack.c.bf16 %v141, %v140
  %v159 = vpack.c.bf16 %v143, %v142
  %v192 = vunpack.c.l.b16 %v80
  %v193 = vunpack.c.h.b16 %v80
  %v194 = vunpack.c.l.b16 %v81
  %v195 = vunpack.c.h.b16 %v81
  %v196 = vunpack.c.l.b16 %v82
  %v197 = vunpack.c.h.b16 %v82
  %v198 = vunpack.c.l.b16 %v83
  %v199 = vunpack.c.h.b16 %v83
  %v200 = vunpack.c.l.b16 %v84
  %v201 = vunpack.c.h.b16 %v84
  %v202 = vunpack.c.l.b16 %v85
  %v203 = vunpack.c.h.b16 %v85
  %v204 = vunpack.c.l.b16 %v86
  %v205 = vunpack.c.h.b16 %v86
  %v206 = vunpack.c.l.b16 %v87
  %v207 = vunpack.c.h.b16 %v87
  %v208 = vunpack.c.l.b16 %v88
  %v209 = vunpack.c.h.b16 %v88
  %v210 = vunpack.c.l.b16 %v89
  %v211 = vunpack.c.h.b16 %v89
  %v212 = vunpack.c.l.b16 %v90
  %v213 = vunpack.c.h.b16 %v90
  %v214 = vunpack.c.l.b16 %v91
  %v215 = vunpack.c.h.b16 %v91
  %v216 = vunpack.c.l.b16 %v92
  %v217 = vunpack.c.h.b16 %v92
  %v218 = vunpack.c.l.b16 %v93
  %v219 = vunpack.c.h.b16 %v93
  %v220 = vunpack.c.l.b16 %v94
  %v221 = vunpack.c.h.b16 %v94
  %v222 = vunpack.c.l.b16 %v95
  %v223 = vunpack.c.h.b16 %v95
  %v224 = vunpack.c.l.b16 %v96
  %v225 = vunpack.c.h.b16 %v96
  %v226 = vunpack.c.l.b16 %v97
  %v227 = vunpack.c.h.b16 %v97
  %v228 = vunpack.c.l.b16 %v98
  %v229 = vunpack.c.h.b16 %v98
  %v230 = vunpack.c.l.b16 %v99
  %v231 = vunpack.c.h.b16 %v99
  %v232 = vunpack.c.l.b16 %v100
  %v233 = vunpack.c.h.b16 %v100
  %v234 = vunpack.c.l.b16 %v101
  %v235 = vunpack.c.h.b16 %v101
  %v236 = vunpack.c.l.b16 %v102
  %v237 = vunpack.c.h.b16 %v102
  %v238 = vunpack.c.l.b16 %v103
  %v239 = vunpack.c.h.b16 %v103
  %v240 = vunpack.c.l.b16 %v104
  %v241 = vunpack.c.h.b16 %v104
  %v242 = vunpack.c.l.b16 %v105
  %v243 = vunpack.c.h.b16 %v105
  %v244 = vunpack.c.l.b16 %v106
  %v245 = vunpack.c.h.b16 %v106
  %v246 = vunpack.c.l.b16 %v107
  %v247 = vunpack.c.h.b16 %v107
  %v248 = vunpack.c.l.b16 %v108
  %v249 = vunpack.c.h.b16 %v108
  %v250 = vunpack.c.l.b16 %v109
  %v251 = vunpack.c.h.b16 %v109
  %v252 = vunpack.c.l.b16 %v110
  %v253 = vunpack.c.h.b16 %v110
  %v254 = vunpack.c.l.b16 %v111
  %v255 = vunpack.c.h.b16 %v111
  %v256 = vpack.c.b16 %v194, %v192
  %v257 = vpack.c.b16 %v195, %v193
  %v258 = vpack.c.b16 %v198, %v196
  %v259 = vpack.c.b16 %v199, %v197
  %v260 = vpack.c.b16 %v202, %v200
  %v261 = vpack.c.b16 %v203, %v201
  %v262 = vpack.c.b16 %v206, %v204
  %v263 = vpack.c.b16 %v207, %v205
  %v264 = vpack.c.b16 %v210, %v208
  %v265 = vpack.c.b16 %v211, %v209
  %v266 = vpack.c.b16 %v214, %v212
  %v267 = vpack.c.b16 %v215, %v213
  %v268 = vpack.c.b16 %v218, %v216
  %v269 = vpack.c.b16 %v219, %v217
  %v270 = vpack.c.b16 %v222, %v220
  %v271 = vpack.c.b16 %v223, %v221
  %v272 = vpack.c.b16 %v226, %v224
  %v273 = vpack.c.b16 %v227, %v225
  %v274 = vpack.c.b16 %v230, %v228
  %v275 = vpack.c.b16 %v231, %v229
  %v276 = vpack.c.b16 %v234, %v232
  %v277 = vpack.c.b16 %v235, %v233
  %v278 = vpack.c.b16 %v238, %v236
  %v279 = vpack.c.b16 %v239, %v237
  %v280 = vpack.c.b16 %v242, %v240
  %v281 = vpack.c.b16 %v243, %v241
  %v282 = vpack.c.b16 %v246, %v244
  %v283 = vpack.c.b16 %v247, %v245
  %v284 = vpack.c.b16 %v250, %v248
  %v285 = vpack.c.b16 %v251, %v249
  %v286 = vpack.c.b16 %v254, %v252
  %v287 = vpack.c.b16 %v255, %v253
  %320 = vmatprep.subr.bf16.mxu0 0
  %321 = vmatpush1.bf16.msra.mxu0 %v151
  %322 = vmatprep.subr.bf16.mxu0 0
  %323 = vmatpush1.bf16.msra.mxu0 %v150
  %324 = vmatprep.subr.bf16.mxu0 0
  %325 = vmatpush1.bf16.msra.mxu0 %v149
  %326 = vmatprep.subr.bf16.mxu0 0
  %327 = vmatpush1.bf16.msra.mxu0 %v148
  %328 = vmatprep.subr.bf16.mxu0 0
  %329 = vmatpush1.bf16.msra.mxu0 %v147
  %330 = vmatprep.subr.bf16.mxu0 0
  %331 = vmatpush1.bf16.msra.mxu0 %v146
  %332 = vmatprep.subr.bf16.mxu0 0
  %333 = vmatpush1.bf16.msra.mxu0 %v145
  %334 = vmatprep.subr.bf16.mxu0 0
  %335 = vmatpush1.bf16.msra.mxu0 %v144
  %336 = vmatprep.subr.bf16.mxu0 0
  %337 = vmatpush2.bf16.msra.mxu0 %v159
  %338 = vmatprep.subr.bf16.mxu0 0
  %339 = vmatpush2.bf16.msra.mxu0 %v158
  %340 = vmatprep.subr.bf16.mxu0 0
  %341 = vmatpush2.bf16.msra.mxu0 %v157
  %342 = vmatprep.subr.bf16.mxu0 0
  %343 = vmatpush2.bf16.msra.mxu0 %v156
  %344 = vmatprep.subr.bf16.mxu0 0
  %345 = vmatpush2.bf16.msra.mxu0 %v155
  %346 = vmatprep.subr.bf16.mxu0 0
  %347 = vmatpush2.bf16.msra.mxu0 %v154
  %348 = vmatprep.subr.bf16.mxu0 0
  %349 = vmatpush2.bf16.msra.mxu0 %v153
  %350 = vmatprep.subr.bf16.mxu0 0
  %351 = vmatpush2.bf16.msra.mxu0 %v152
  %352 = vmatprep.mubr.bf16.mxu0 %v257
  %353 = vmatmul.mubr.bf16.gmra.mxu0 %v256
  %v354 = vpop.f32.mrf.mxu0
  %v355 = vadd.f32 0.0, %v354
  %v356 = vpop.f32.mrf.mxu0
  %v357 = vpop.f32.mrf.mxu0
  %v358 = vadd.f32 0.0, %v357
  %v359 = vpop.f32.mrf.mxu0
  %360 = vmatprep.mubr.bf16.mxu0 %v259
  %361 = vmatmul.mubr.bf16.gmra.mxu0 %v258
  %v362 = vpop.f32.mrf.mxu0
  %v363 = vadd.f32 0.0, %v362
  %v364 = vpop.f32.mrf.mxu0
  %v365 = vpop.f32.mrf.mxu0
  %v366 = vadd.f32 0.0, %v365
  %v367 = vpop.f32.mrf.mxu0
  %368 = vmatprep.mubr.bf16.mxu0 %v261
  %369 = vmatmul.mubr.bf16.gmra.mxu0 %v260
  %v370 = vpop.f32.mrf.mxu0
  %v371 = vadd.f32 0.0, %v370
  %v372 = vpop.f32.mrf.mxu0
  %v373 = vpop.f32.mrf.mxu0
  %v374 = vadd.f32 0.0, %v373
  %v375 = vpop.f32.mrf.mxu0
  %376 = vmatprep.mubr.bf16.mxu0 %v263
  %377 = vmatmul.mubr.bf16.gmra.mxu0 %v262
  %v378 = vpop.f32.mrf.mxu0
  %v379 = vadd.f32 0.0, %v378
  %v380 = vpop.f32.mrf.mxu0
  %v381 = vpop.f32.mrf.mxu0
  %v382 = vadd.f32 0.0, %v381
  %v383 = vpop.f32.mrf.mxu0
  %384 = vmatprep.mubr.bf16.mxu0 %v265
  %385 = vmatmul.mubr.bf16.gmra.mxu0 %v264
  %v386 = vpop.f32.mrf.mxu0
  %v387 = vadd.f32 0.0, %v386
  %v388 = vpop.f32.mrf.mxu0
  %v389 = vpop.f32.mrf.mxu0
  %v390 = vadd.f32 0.0, %v389
  %v391 = vpop.f32.mrf.mxu0
  %392 = vmatprep.mubr.bf16.mxu0 %v267
  %393 = vmatmul.mubr.bf16.gmra.mxu0 %v266
  %v394 = vpop.f32.mrf.mxu0
  %v395 = vadd.f32 0.0, %v394
  %v396 = vpop.f32.mrf.mxu0
  %v397 = vpop.f32.mrf.mxu0
  %v398 = vadd.f32 0.0, %v397
  %v399 = vpop.f32.mrf.mxu0
  %400 = vmatprep.mubr.bf16.mxu0 %v269
  %401 = vmatmul.mubr.bf16.gmra.mxu0 %v268
  %v402 = vpop.f32.mrf.mxu0
  %v403 = vadd.f32 0.0, %v402
  %v404 = vpop.f32.mrf.mxu0
  %v405 = vpop.f32.mrf.mxu0
  %v406 = vadd.f32 0.0, %v405
  %v407 = vpop.f32.mrf.mxu0
  %408 = vmatprep.mubr.bf16.mxu0 %v271
  %409 = vmatmul.mubr.bf16.gmra.mxu0 %v270
  %v410 = vpop.f32.mrf.mxu0
  %v411 = vadd.f32 0.0, %v410
  %v412 = vpop.f32.mrf.mxu0
  %v413 = vpop.f32.mrf.mxu0
  %v414 = vadd.f32 0.0, %v413
  %v415 = vpop.f32.mrf.mxu0
  %416 = vmatprep.mubr.bf16.mxu0 %v273
  %417 = vmatmul.mubr.bf16.gmra.mxu0 %v272
  %v418 = vpop.f32.mrf.mxu0
  %v419 = vadd.f32 0.0, %v418
  %v420 = vpop.f32.mrf.mxu0
  %v421 = vpop.f32.mrf.mxu0
  %v422 = vadd.f32 0.0, %v421
  %v423 = vpop.f32.mrf.mxu0
  %424 = vmatprep.mubr.bf16.mxu0 %v275
  %425 = vmatmul.mubr.bf16.gmra.mxu0 %v274
  %v426 = vpop.f32.mrf.mxu0
  %v427 = vadd.f32 0.0, %v426
  %v428 = vpop.f32.mrf.mxu0
  %v429 = vpop.f32.mrf.mxu0
  %v430 = vadd.f32 0.0, %v429
  %v431 = vpop.f32.mrf.mxu0
  %432 = vmatprep.mubr.bf16.mxu0 %v277
  %433 = vmatmul.mubr.bf16.gmra.mxu0 %v276
  %v434 = vpop.f32.mrf.mxu0
  %v435 = vadd.f32 0.0, %v434
  %v436 = vpop.f32.mrf.mxu0
  %v437 = vpop.f32.mrf.mxu0
  %v438 = vadd.f32 0.0, %v437
  %v439 = vpop.f32.mrf.mxu0
  %440 = vmatprep.mubr.bf16.mxu0 %v279
  %441 = vmatmul.mubr.bf16.gmra.mxu0 %v278
  %v442 = vpop.f32.mrf.mxu0
  %v443 = vadd.f32 0.0, %v442
  %v444 = vpop.f32.mrf.mxu0
  %v445 = vpop.f32.mrf.mxu0
  %v446 = vadd.f32 0.0, %v445
  %v447 = vpop.f32.mrf.mxu0
  %448 = vmatprep.mubr.bf16.mxu0 %v281
  %449 = vmatmul.mubr.bf16.gmra.mxu0 %v280
  %v450 = vpop.f32.mrf.mxu0
  %v451 = vadd.f32 0.0, %v450
  %v452 = vpop.f32.mrf.mxu0
  %v453 = vpop.f32.mrf.mxu0
  %v454 = vadd.f32 0.0, %v453
  %v455 = vpop.f32.mrf.mxu0
  %456 = vmatprep.mubr.bf16.mxu0 %v283
  %457 = vmatmul.mubr.bf16.gmra.mxu0 %v282
  %v458 = vpop.f32.mrf.mxu0
  %v459 = vadd.f32 0.0, %v458
  %v460 = vpop.f32.mrf.mxu0
  %v461 = vpop.f32.mrf.mxu0
  %v462 = vadd.f32 0.0, %v461
  %v463 = vpop.f32.mrf.mxu0
  %464 = vmatprep.mubr.bf16.mxu0 %v285
  %465 = vmatmul.mubr.bf16.gmra.mxu0 %v284
  %v466 = vpop.f32.mrf.mxu0
  %v467 = vadd.f32 0.0, %v466
  %v468 = vpop.f32.mrf.mxu0
  %v469 = vpop.f32.mrf.mxu0
  %v470 = vadd.f32 0.0, %v469
  %v471 = vpop.f32.mrf.mxu0
  %472 = vmatprep.mubr.bf16.mxu0 %v287
  %473 = vmatmul.mubr.bf16.gmra.mxu0 %v286
  %v474 = vpop.f32.mrf.mxu0
  %v475 = vadd.f32 0.0, %v474
  %v476 = vpop.f32.mrf.mxu0
  %v477 = vpop.f32.mrf.mxu0
  %v478 = vadd.f32 0.0, %v477
  %v479 = vpop.f32.mrf.mxu0
  %480 = vdwg.mxu0
  %v481 = vadd.f32 %v48, %v355
  %v482 = vadd.f32 %v49, %v358
  %v483 = vadd.f32 %v50, %v363
  %v484 = vadd.f32 %v51, %v366
  %v485 = vadd.f32 %v52, %v371
  %v486 = vadd.f32 %v53, %v374
  %v487 = vadd.f32 %v54, %v379
  %v488 = vadd.f32 %v55, %v382
  %v489 = vadd.f32 %v56, %v387
  %v490 = vadd.f32 %v57, %v390
  %v491 = vadd.f32 %v58, %v395
  %v492 = vadd.f32 %v59, %v398
  %v493 = vadd.f32 %v60, %v403
  %v494 = vadd.f32 %v61, %v406
  %v495 = vadd.f32 %v62, %v411
  %v496 = vadd.f32 %v63, %v414
  %v497 = vadd.f32 %v64, %v419
  %v498 = vadd.f32 %v65, %v422
  %v499 = vadd.f32 %v66, %v427
  %v500 = vadd.f32 %v67, %v430
  %v501 = vadd.f32 %v68, %v435
  %v502 = vadd.f32 %v69, %v438
  %v503 = vadd.f32 %v70, %v443
  %v504 = vadd.f32 %v71, %v446
  %v505 = vadd.f32 %v72, %v451
  %v506 = vadd.f32 %v73, %v454
  %v507 = vadd.f32 %v74, %v459
  %v508 = vadd.f32 %v75, %v462
  %v509 = vadd.f32 %v76, %v467
  %v510 = vadd.f32 %v77, %v470
  %v511 = vadd.f32 %v78, %v475
  %v512 = vadd.f32 %v79, %v478
  %513 = vst [vmem:[#allocation2] sm:$0xff] %v481
  %514 = vst [vmem:[#allocation2 + $0x8] sm:$0xff] %v482
  %515 = vst [vmem:[#allocation2 + $0x10] sm:$0xff] %v483
  %516 = vst [vmem:[#allocation2 + $0x18] sm:$0xff] %v484
  %517 = vst [vmem:[#allocation2 + $0x20] sm:$0xff] %v485
  %518 = vst [vmem:[#allocation2 + $0x28] sm:$0xff] %v486
  %519 = vst [vmem:[#allocation2 + $0x30] sm:$0xff] %v487
  %520 = vst [vmem:[#allocation2 + $0x38] sm:$0xff] %v488
  %521 = vst [vmem:[#allocation2 + $0x40] sm:$0xff] %v489
  %522 = vst [vmem:[#allocation2 + $0x48] sm:$0xff] %v490
  %523 = vst [vmem:[#allocation2 + $0x50] sm:$0xff] %v491
  %524 = vst [vmem:[#allocation2 + $0x58] sm:$0xff] %v492
  %525 = vst [vmem:[#allocation2 + $0x60] sm:$0xff] %v493
  %526 = vst [vmem:[#allocation2 + $0x68] sm:$0xff] %v494
  %527 = vst [vmem:[#allocation2 + $0x70] sm:$0xff] %v495
  %528 = vst [vmem:[#allocation2 + $0x78] sm:$0xff] %v496
  %529 = vst [vmem:[#allocation2 + $0x80] sm:$0xff] %v497
  %530 = vst [vmem:[#allocation2 + $0x88] sm:$0xff] %v498
  %531 = vst [vmem:[#allocation2 + $0x90] sm:$0xff] %v499
  %532 = vst [vmem:[#allocation2 + $0x98] sm:$0xff] %v500
  %533 = vst [vmem:[#allocation2 + $0xa0] sm:$0xff] %v501
  %534 = vst [vmem:[#allocation2 + $0xa8] sm:$0xff] %v502
  %535 = vst [vmem:[#allocation2 + $0xb0] sm:$0xff] %v503
  %536 = vst [vmem:[#allocation2 + $0xb8] sm:$0xff] %v504
  %537 = vst [vmem:[#allocation2 + $0xc0] sm:$0xff] %v505
  %538 = vst [vmem:[#allocation2 + $0xc8] sm:$0xff] %v506
  %539 = vst [vmem:[#allocation2 + $0xd0] sm:$0xff] %v507
  %540 = vst [vmem:[#allocation2 + $0xd8] sm:$0xff] %v508
  %541 = vst [vmem:[#allocation2 + $0xe0] sm:$0xff] %v509
  %542 = vst [vmem:[#allocation2 + $0xe8] sm:$0xff] %v510
  %543 = vst [vmem:[#allocation2 + $0xf0] sm:$0xff] %v511
  %544 = vst [vmem:[#allocation2 + $0xf8] sm:$0xff] %v512
  // Predicated region
  $region14: #{gcn_v_forward.5} parent=0 // pred_check
    %p545 = pneg %p12
  $region15: #{gcn_v_forward.5} parent=0 // pred_check_branch
    %547 = sbr.rel (%p545) target = $region17
  $region16: #{gcn_v_forward.5} parent=0 // pred_region
    %v548 = vld [vmem:[#allocation2] sm:$0xff]
    %v549 = vld [vmem:[#allocation2 + $0x8] sm:$0xff]
    %v550 = vld [vmem:[#allocation2 + $0x10] sm:$0xff]
    %v551 = vld [vmem:[#allocation2 + $0x18] sm:$0xff]
    %v552 = vld [vmem:[#allocation2 + $0x20] sm:$0xff]
    %v553 = vld [vmem:[#allocation2 + $0x28] sm:$0xff]
    %v554 = vld [vmem:[#allocation2 + $0x30] sm:$0xff]
    %v555 = vld [vmem:[#allocation2 + $0x38] sm:$0xff]
    %v556 = vld [vmem:[#allocation2 + $0x40] sm:$0xff]
    %v557 = vld [vmem:[#allocation2 + $0x48] sm:$0xff]
    %v558 = vld [vmem:[#allocation2 + $0x50] sm:$0xff]
    %v559 = vld [vmem:[#allocation2 + $0x58] sm:$0xff]
    %v560 = vld [vmem:[#allocation2 + $0x60] sm:$0xff]
    %v561 = vld [vmem:[#allocation2 + $0x68] sm:$0xff]
    %v562 = vld [vmem:[#allocation2 + $0x70] sm:$0xff]
    %v563 = vld [vmem:[#allocation2 + $0x78] sm:$0xff]
    %v564 = vld [vmem:[#allocation2 + $0x80] sm:$0xff]
    %v565 = vld [vmem:[#allocation2 + $0x88] sm:$0xff]
    %v566 = vld [vmem:[#allocation2 + $0x90] sm:$0xff]
    %v567 = vld [vmem:[#allocation2 + $0x98] sm:$0xff]
    %v568 = vld [vmem:[#allocation2 + $0xa0] sm:$0xff]
    %v569 = vld [vmem:[#allocation2 + $0xa8] sm:$0xff]
    %v570 = vld [vmem:[#allocation2 + $0xb0] sm:$0xff]
    %v571 = vld [vmem:[#allocation2 + $0xb8] sm:$0xff]
    %v572 = vld [vmem:[#allocation2 + $0xc0] sm:$0xff]
    %v573 = vld [vmem:[#allocation2 + $0xc8] sm:$0xff]
    %v574 = vld [vmem:[#allocation2 + $0xd0] sm:$0xff]
    %v575 = vld [vmem:[#allocation2 + $0xd8] sm:$0xff]
    %v576 = vld [vmem:[#allocation2 + $0xe0] sm:$0xff]
    %v577 = vld [vmem:[#allocation2 + $0xe8] sm:$0xff]
    %v578 = vld [vmem:[#allocation2 + $0xf0] sm:$0xff]
    %v579 = vld [vmem:[#allocation2 + $0xf8] sm:$0xff]
    %580 = vst [vmem:[%s2] sm:$0xff] %v548
    %581 = vst [vmem:[%s2 + $0x8] sm:$0xff] %v549
    %582 = vst [vmem:[%s2 + $0x10] sm:$0xff] %v550
    %583 = vst [vmem:[%s2 + $0x18] sm:$0xff] %v551
    %584 = vst [vmem:[%s2 + $0x20] sm:$0xff] %v552
    %585 = vst [vmem:[%s2 + $0x28] sm:$0xff] %v553
    %586 = vst [vmem:[%s2 + $0x30] sm:$0xff] %v554
    %587 = vst [vmem:[%s2 + $0x38] sm:$0xff] %v555
    %588 = vst [vmem:[%s2 + $0x40] sm:$0xff] %v556
    %589 = vst [vmem:[%s2 + $0x48] sm:$0xff] %v557
    %590 = vst [vmem:[%s2 + $0x50] sm:$0xff] %v558
    %591 = vst [vmem:[%s2 + $0x58] sm:$0xff] %v559
    %592 = vst [vmem:[%s2 + $0x60] sm:$0xff] %v560
    %593 = vst [vmem:[%s2 + $0x68] sm:$0xff] %v561
    %594 = vst [vmem:[%s2 + $0x70] sm:$0xff] %v562
    %595 = vst [vmem:[%s2 + $0x78] sm:$0xff] %v563
    %596 = vst [vmem:[%s2 + $0x80] sm:$0xff] %v564
    %597 = vst [vmem:[%s2 + $0x88] sm:$0xff] %v565
    %598 = vst [vmem:[%s2 + $0x90] sm:$0xff] %v566
    %599 = vst [vmem:[%s2 + $0x98] sm:$0xff] %v567
    %600 = vst [vmem:[%s2 + $0xa0] sm:$0xff] %v568
    %601 = vst [vmem:[%s2 + $0xa8] sm:$0xff] %v569
    %602 = vst [vmem:[%s2 + $0xb0] sm:$0xff] %v570
    %603 = vst [vmem:[%s2 + $0xb8] sm:$0xff] %v571
    %604 = vst [vmem:[%s2 + $0xc0] sm:$0xff] %v572
    %605 = vst [vmem:[%s2 + $0xc8] sm:$0xff] %v573
    %606 = vst [vmem:[%s2 + $0xd0] sm:$0xff] %v574
    %607 = vst [vmem:[%s2 + $0xd8] sm:$0xff] %v575
    %608 = vst [vmem:[%s2 + $0xe0] sm:$0xff] %v576
    %609 = vst [vmem:[%s2 + $0xe8] sm:$0xff] %v577
    %610 = vst [vmem:[%s2 + $0xf0] sm:$0xff] %v578
    %611 = vst [vmem:[%s2 + $0xf8] sm:$0xff] %v579
  $region17: #{gcn_v_forward.5} parent=0 // pred_fallthru
    _
  // Predicated region
  $region18: #{gcn_v_forward.5} parent=0 // pred_check
    _
  $region19: #{gcn_v_forward.5} parent=0 // pred_check_branch
    %613 = sbr.rel (0) target = $region21
  $region20: #{gcn_v_forward.5} parent=0 // pred_region
    _
  $region21: #{gcn_v_forward.5} parent=0 // pred_fallthru
    _
  // Predicated region
  $region22: #{gcn_v_forward.5} parent=0 // pred_check
    _
  $region23: #{gcn_v_forward.5} parent=0 // pred_check_branch
    %615 = sbr.rel (0) target = $region25
  $region24: #{gcn_v_forward.5} parent=0 // pred_region
    _
  $region25: #{gcn_v_forward.5} parent=0 // pred_fallthru
    _

</llo_original>
